<compile_context>
chip_gen: v6e
topology: v6e:2x2x1
jax: 0.10.0
libtpu: 0.0.40
codegen_flags: <defaults>
</compile_context>

<pallas_src>
import math
import functools

import jax
import jax.numpy as jnp
from jax import lax
from jax.experimental import pallas as pl
from jax.experimental.pallas import tpu as pltpu


# --------------------------- Kernel 1: QKV + RoPE ----------------------------
def _qkv_rope_kernel(x_ref, wq_ref, wk_ref, wv_ref, cos_ref, sin_ref,
                     q_ref, k_ref, v_ref, *, n_heads, n_kv_heads, head_dim):
    x = x_ref[...]                            # (tl, dim)
    cos = cos_ref[...]                        # (tl, hd)  [ cos | cos ]
    sin = sin_ref[...]                        # (tl, hd)  [ -sin | sin ]  (pre-signed)
    half = head_dim // 2

    def rope(t):
        # rotate-half in the de-interleaved basis; the sign lives in `sin`,
        # so the rotation is a single XLU lane-roll (no negate / concat).
        return t * cos + pltpu.roll(t, shift=half, axis=1) * sin

    # One wide matmul per projection (full MXU N-dim), f32 accumulation.
    yq = jnp.dot(x, wq_ref[...], preferred_element_type=jnp.float32)
    yk = jnp.dot(x, wk_ref[...], preferred_element_type=jnp.float32)
    yv = jnp.dot(x, wv_ref[...], preferred_element_type=jnp.float32)

    # Per-head 128-lane-aligned slices stored directly head-major: no relayout.
    for h in range(n_heads):
        q_ref[h] = rope(yq[:, h * head_dim:(h + 1) * head_dim]).astype(q_ref.dtype)
    for h in range(n_kv_heads):
        k_ref[h] = rope(yk[:, h * head_dim:(h + 1) * head_dim]).astype(k_ref.dtype)
        v_ref[h] = yv[:, h * head_dim:(h + 1) * head_dim].astype(v_ref.dtype)


# ---------------- Kernel 2: flash attention + output projection --------------
def _flash_attn_wo_kernel(q_ref, k_ref, v_ref, wo_ref, o_ref,
                          m_sc, l_sc, acc_sc,
                          *, n_kv_heads, n_rep, block_q, block_kv):
    qi = pl.program_id(1)
    ki = pl.program_id(2)
    head_dim = q_ref.shape[-1]
    mq = n_rep * block_q                      # merged (rep, q) row count

    @pl.when(ki == 0)
    def _():
        m_sc[...] = jnp.full(m_sc.shape, -jnp.inf, m_sc.dtype)
        l_sc[...] = jnp.zeros(l_sc.shape, l_sc.dtype)
        acc_sc[...] = jnp.zeros(acc_sc.shape, acc_sc.dtype)

    q_first = qi * block_q
    q_last = q_first + block_q - 1
    k_first = ki * block_kv
    k_last = k_first + block_kv - 1
    in_range = k_first <= q_last              # kv tile touches the causal region
    crosses = k_last > q_first                # kv tile crosses the diagonal

    def flash_step(apply_mask):
        # GQA without jnp.repeat: fold the per-group query heads into the row
        # axis; both einsums batch over n_kv_heads with M = n_rep * tq.
        q = q_ref[...].reshape(n_kv_heads, mq, head_dim)
        k = k_ref[...]                                         # (g, tk, hd)
        v = v_ref[...]
        # 1/sqrt(head_dim) is folded into Wq on the host -> no score scaling.
        s = jnp.einsum('gqd,gkd->gqk', q, k,
                       preferred_element_type=jnp.float32)     # (g, mq, tk)
        if apply_mask:
            rows = q_first + (lax.broadcasted_iota(
                jnp.int32, (mq, block_kv), 0) % block_q)
            cols = k_first + lax.broadcasted_iota(
                jnp.int32, (mq, block_kv), 1)
            # large finite negative keeps the math NaN-safe in f32
            s = jnp.where((cols <= rows)[None, :, :], s, -1e30)
        m_prev = m_sc[...]
        m_new = jnp.maximum(m_prev, jnp.max(s, axis=-1, keepdims=True))
        alpha = jnp.exp(m_prev - m_new)
        p = jnp.exp(s - m_new)
        l_sc[...] = alpha * l_sc[...] + jnp.sum(p, axis=-1, keepdims=True)
        acc_sc[...] = alpha * acc_sc[...] + jnp.einsum(
            'gqk,gkd->gqd', p.astype(v.dtype), v,
            preferred_element_type=jnp.float32)
        m_sc[...] = m_new

    # Mask only on diagonal-crossing tiles; strictly-below-diagonal tiles skip
    # the iotas / compare / select; above-diagonal tiles do nothing at all.
    @pl.when(jnp.logical_and(in_range, crosses))
    def _():
        flash_step(apply_mask=True)

    @pl.when(jnp.logical_and(in_range, jnp.logical_not(crosses)))
    def _():
        flash_step(apply_mask=False)

    @pl.when(ki == pl.num_programs(2) - 1)
    def _():
        # exact normalization (epilogue-only, negligible cost), fold heads,
        # single Hd-wide MXU matmul, lane-dense output (last dim = dim).
        o = acc_sc[...] / l_sc[...]                            # (g, rep*tq, hd)
        o = o.reshape(n_kv_heads, n_rep, block_q, head_dim)
        o = jnp.transpose(o, (2, 0, 1, 3)).reshape(
            block_q, n_kv_heads * n_rep * head_dim)
        out = jnp.dot(o.astype(wo_ref.dtype), wo_ref[...],
                      preferred_element_type=jnp.float32)
        o_ref[...] = out.astype(o_ref.dtype)


# --------------------------------- helpers -----------------------------------
def _pick_vmem_limit_bytes():
    # Generation-aware VMEM budget: ~100 MiB on 128-MiB parts (v5e/v6e),
    # capacity minus a safety margin on 64-MiB parts (v7x).
    try:
        cap = pltpu.get_tpu_info().vmem_capacity_bytes
    except Exception:
        cap = 64 * 1024 * 1024
    return int(min(100 * 1024 * 1024, cap - 12 * 1024 * 1024))


def _resident_weight_spec(shape, index_map):
    # Constant-index weight blocks: single-buffered (no DMA overlap to gain;
    # halves their VMEM footprint). Fall back gracefully if this jax build's
    # BlockSpec has no pipeline_mode kwarg.
    try:
        return pl.BlockSpec(shape, index_map, pipeline_mode=pl.Buffered(1))
    except TypeError:
        return pl.BlockSpec(shape, index_map)


# --------------------------------- wrapper -----------------------------------
def attention_forward(x, wq, wk, wv, wo, freqs_cos, freqs_sin,
                      *, n_heads, n_kv_heads,
                      block_l=None, block_q=None, block_kv=None,
                      vmem_limit_bytes=None):
    """x: (B, L, dim); wq/wk/wv/wo: nn.Linear-style (out, in) weights (native
    dtype, bf16 welcome); freqs_cos/sin: (L, head_dim // 2)."""
    B, L, dim = x.shape
    head_dim = dim // n_heads
    n_rep = n_heads // n_kv_heads
    Hd = n_heads * head_dim
    Kd = n_kv_heads * head_dim

    # 256-wide tiles by default: fill the 256x256 MXU on v6e/v7x and halve
    # K/V HBM re-reads vs 128-wide tiles (on v5e this still buys bandwidth).
    block_l = 256 if block_l is None else block_l
    block_q = 256 if block_q is None else block_q
    block_kv = 256 if block_kv is None else block_kv
    tl, tq, tk = min(block_l, L), min(block_q, L), min(block_kv, L)
    assert L % tl == 0 and L % tq == 0 and L % tk == 0

    if vmem_limit_bytes is None:
        vmem_limit_bytes = _pick_vmem_limit_bytes()

    # Host-side prep (done once): transpose Linear weights to (in, out),
    # permute Wq/Wk output columns into the de-interleaved (real|imag) basis,
    # and fold the 1/sqrt(head_dim) attention scale into Wq. Native dtype is
    # preserved (no f32 up-cast; bf16 inputs keep bf16 MXU operands).
    scale = 1.0 / math.sqrt(head_dim)
    perm = jnp.concatenate([jnp.arange(0, head_dim, 2),
                            jnp.arange(1, head_dim, 2)])
    wq_t = (wq.T.reshape(dim, n_heads, head_dim)[:, :, perm]
            .reshape(dim, Hd) * scale).astype(wq.dtype)
    wk_t = wk.T.reshape(dim, n_kv_heads, head_dim)[:, :, perm].reshape(dim, Kd)
    wv_t = wv.T
    wo_t = wo.T

    # cos/sin kept at (L, head_dim), broadcast per head in-kernel; the rotation
    # sign is folded into the first half of the sin table.
    cos = jnp.concatenate([freqs_cos, freqs_cos], axis=-1).astype(jnp.float32)
    sin = jnp.concatenate([-freqs_sin, freqs_sin], axis=-1).astype(jnp.float32)

    # ------------------------- kernel 1: QKV + RoPE --------------------------
    qkv_kernel = functools.partial(_qkv_rope_kernel, n_heads=n_heads,
                                   n_kv_heads=n_kv_heads, head_dim=head_dim)
    q_hm, k_hm, v_hm = pl.pallas_call(
        qkv_kernel,
        out_shape=(
            jax.ShapeDtypeStruct((B, n_heads, L, head_dim), x.dtype),
            jax.ShapeDtypeStruct((B, n_kv_heads, L, head_dim), x.dtype),
            jax.ShapeDtypeStruct((B, n_kv_heads, L, head_dim), x.dtype),
        ),
        grid_spec=pltpu.PrefetchScalarGridSpec(
            num_scalar_prefetch=0,
            grid=(B, L // tl),
            in_specs=[
                pl.BlockSpec((pl.Squeezed(), tl, dim), lambda b, l: (b, l, 0)),
                _resident_weight_spec((dim, Hd), lambda b, l: (0, 0)),  # wq_t
                _resident_weight_spec((dim, Kd), lambda b, l: (0, 0)),  # wk_t
                _resident_weight_spec((dim, Kd), lambda b, l: (0, 0)),  # wv_t
                pl.BlockSpec((tl, head_dim), lambda b, l: (l, 0)),      # cos
                pl.BlockSpec((tl, head_dim), lambda b, l: (l, 0)),      # sin
            ],
            out_specs=[
                pl.BlockSpec((pl.Squeezed(), n_heads, tl, head_dim),
                             lambda b, l: (b, 0, l, 0)),
                pl.BlockSpec((pl.Squeezed(), n_kv_heads, tl, head_dim),
                             lambda b, l: (b, 0, l, 0)),
                pl.BlockSpec((pl.Squeezed(), n_kv_heads, tl, head_dim),
                             lambda b, l: (b, 0, l, 0)),
            ],
        ),
        compiler_params=pltpu.CompilerParams(
            dimension_semantics=("parallel", "parallel"),
            vmem_limit_bytes=vmem_limit_bytes),
    )(x, wq_t, wk_t, wv_t, cos, sin)

    # --------------- kernel 2: flash attention + output projection -----------
    attn_kernel = functools.partial(_flash_attn_wo_kernel,
                                    n_kv_heads=n_kv_heads, n_rep=n_rep,
                                    block_q=tq, block_kv=tk)

    def kv_index_map(b, i, j):
        # Clamp causally-skipped kv blocks to the last needed block so the
        # auto-pipeline elides their K/V DMAs (compute is skipped by pl.when).
        return (b, 0, jnp.minimum(j, ((i + 1) * tq - 1) // tk), 0)

    out = pl.pallas_call(
        attn_kernel,
        out_shape=jax.ShapeDtypeStruct((B, L, dim), x.dtype),
        grid_spec=pltpu.PrefetchScalarGridSpec(
            num_scalar_prefetch=0,
            grid=(B, L // tq, L // tk),          # kv (reduction) axis last
            in_specs=[
                pl.BlockSpec((pl.Squeezed(), n_heads, tq, head_dim),
                             lambda b, i, j: (b, 0, i, 0)),            # Q
                pl.BlockSpec((pl.Squeezed(), n_kv_heads, tk, head_dim),
                             kv_index_map),                             # K
                pl.BlockSpec((pl.Squeezed(), n_kv_heads, tk, head_dim),
                             kv_index_map),                             # V
                _resident_weight_spec((Hd, dim), lambda b, i, j: (0, 0)),  # Wo
            ],
            out_specs=pl.BlockSpec((pl.Squeezed(), tq, dim),
                                   lambda b, i, j: (b, i, 0)),
            scratch_shapes=[
                pltpu.VMEM((n_kv_heads, n_rep * tq, 1), jnp.float32),   # m
                pltpu.VMEM((n_kv_heads, n_rep * tq, 1), jnp.float32),   # l
                pltpu.VMEM((n_kv_heads, n_rep * tq, head_dim), jnp.float32),
            ],
        ),
        compiler_params=pltpu.CompilerParams(
            dimension_semantics=("parallel", "parallel", "arbitrary"),
            vmem_limit_bytes=vmem_limit_bytes),
    )(q_hm, k_hm, v_hm, wo_t)

    # TODO(synk): attn_dropout / resid_dropout have p=0.0 (ModelArgs default /
    # inference), so dropout is intentionally omitted.
    return out


# -------------------- pure-JAX reference (mirrors the PyTorch code) ----------
def attention_reference(x, wq, wk, wv, wo, freqs_cos, freqs_sin,
                        *, n_heads, n_kv_heads):
    B, L, dim = x.shape
    hd = dim // n_heads
    n_rep = n_heads // n_kv_heads

    xq = (x @ wq.T).reshape(B, L, n_heads, hd)
    xk = (x @ wk.T).reshape(B, L, n_kv_heads, hd)
    xv = (x @ wv.T).reshape(B, L, n_kv_heads, hd)

    def rope(t):
        tr = t.reshape(t.shape[:-1] + (hd // 2, 2))
        t_r, t_i = tr[..., 0], tr[..., 1]
        cos = freqs_cos[None, :, None, :]
        sin = freqs_sin[None, :, None, :]
        o_r = t_r * cos - t_i * sin
        o_i = t_r * sin + t_i * cos
        return jnp.stack([o_r, o_i], axis=-1).reshape(t.shape)

    xq, xk = rope(xq), rope(xk)
    xk = jnp.repeat(xk, n_rep, axis=2)
    xv = jnp.repeat(xv, n_rep, axis=2)
    xq, xk, xv = (t.transpose(0, 2, 1, 3) for t in (xq, xk, xv))

    s = jnp.einsum('bhqd,bhkd->bhqk', xq, xk) / math.sqrt(hd)
    mask = jnp.tril(jnp.ones((L, L), bool))
    s = jnp.where(mask[None, None], s, -jnp.inf)
    p = jax.nn.softmax(s, axis=-1)
    o = jnp.einsum('bhqk,bhkd->bhqd', p, xv)
    o = o.transpose(0, 2, 1, 3).reshape(B, L, n_heads * hd)
    return o @ wo.T


if __name__ == "__main__":
    # small config, lane-aligned head_dim (128), GQA with n_rep = 2
    B, L = 2, 32
    n_heads, n_kv_heads = 2, 1
    head_dim = 128
    dim = n_heads * head_dim           # 256

    key = jax.random.PRNGKey(0)
    kx, kq, kk, kv_, ko = jax.random.split(key, 5)
    x = jax.random.normal(kx, (B, L, dim), jnp.float32)
    wq = jax.random.normal(kq, (n_heads * head_dim, dim), jnp.float32) * 0.02
    wk = jax.random.normal(kk, (n_kv_heads * head_dim, dim), jnp.float32) * 0.02
    wv = jax.random.normal(kv_, (n_kv_heads * head_dim, dim), jnp.float32) * 0.02
    wo = jax.random.normal(ko, (dim, n_heads * head_dim), jnp.float32) * 0.02

    # precompute_freqs_cis (llama-style), deterministic
    inv = 1.0 / (10000.0 ** (jnp.arange(0, head_dim, 2, dtype=jnp.float32)
                             / head_dim))
    t = jnp.arange(L, dtype=jnp.float32)
    freqs = jnp.outer(t, inv)                  # (L, hd//2)
    freqs_cos = jnp.cos(freqs)
    freqs_sin = jnp.sin(freqs)

    # small blocks so the grid has multiple q/kv steps (exercises the masked,
    # unmasked and causally-skipped paths plus the DMA clamp).
    out = attention_forward(x, wq, wk, wv, wo, freqs_cos, freqs_sin,
                            n_heads=n_heads, n_kv_heads=n_kv_heads,
                            block_l=16, block_q=16, block_kv=16)
    out = jax.block_until_ready(out)

    ref = attention_reference(x, wq, wk, wv, wo, freqs_cos, freqs_sin,
                              n_heads=n_heads, n_kv_heads=n_kv_heads)
    assert out.shape == (B, L, dim)
    err = jnp.max(jnp.abs(out - ref))
    assert jnp.allclose(out, ref, atol=2e-3, rtol=2e-3), f"max err {err}"
    print("KERNEL_OK")
</pallas_src>

<mosaic_0001>
module attributes {stable_mosaic.version = 11 : i64} {
  func.func @_qkv_rope_kernel(%arg0: i32, %arg1: i32, %arg2: memref<1x16x256xf32, #tpu.memory_space<vmem>>, %arg3: memref<256x256xf32, #tpu.memory_space<vmem>>, %arg4: memref<256x128xf32, #tpu.memory_space<vmem>>, %arg5: memref<256x128xf32, #tpu.memory_space<vmem>>, %arg6: memref<16x128xf32, #tpu.memory_space<vmem>>, %arg7: memref<16x128xf32, #tpu.memory_space<vmem>>, %arg8: memref<1x2x16x128xf32, #tpu.memory_space<vmem>>, %arg9: memref<1x1x16x128xf32, #tpu.memory_space<vmem>>, %arg10: memref<1x1x16x128xf32, #tpu.memory_space<vmem>>) attributes {dimension_semantics = [#tpu.dimension_semantics<parallel>, #tpu.dimension_semantics<parallel>], iteration_bounds = array<i64: 2, 2>, scalar_prefetch = 0 : i64, scratch_operands = 0 : i64, tpu.core_type = #tpu.core_type<tc>, window_params = [{transform_indices = @transform_0, window_bounds = array<i64: 1, 16, 256>}, {pipeline_mode = #tpu.pipeline_mode<synchronous>, transform_indices = @transform_1, window_bounds = array<i64: 256, 256>}, {pipeline_mode = #tpu.pipeline_mode<synchronous>, transform_indices = @transform_2, window_bounds = array<i64: 256, 128>}, {pipeline_mode = #tpu.pipeline_mode<synchronous>, transform_indices = @transform_3, window_bounds = array<i64: 256, 128>}, {transform_indices = @transform_4, window_bounds = array<i64: 16, 128>}, {transform_indices = @transform_5, window_bounds = array<i64: 16, 128>}, {transform_indices = @transform_6, window_bounds = array<i64: 1, 2, 16, 128>}, {transform_indices = @transform_7, window_bounds = array<i64: 1, 1, 16, 128>}, {transform_indices = @transform_8, window_bounds = array<i64: 1, 1, 16, 128>}]} {
    %c0 = arith.constant 0 : index
    %c0_0 = arith.constant 0 : index
    %c0_1 = arith.constant 0 : index
    %0 = vector.load %arg2[%c0, %c0_0, %c0_1] : memref<1x16x256xf32, #tpu.memory_space<vmem>>, vector<1x16x256xf32>
    %1 = vector.shape_cast %0 : vector<1x16x256xf32> to vector<16x256xf32>
    %c0_2 = arith.constant 0 : index
    %c0_3 = arith.constant 0 : index
    %2 = vector.load %arg6[%c0_2, %c0_3] : memref<16x128xf32, #tpu.memory_space<vmem>>, vector<16x128xf32>
    %c0_4 = arith.constant 0 : index
    %c0_5 = arith.constant 0 : index
    %3 = vector.load %arg7[%c0_4, %c0_5] : memref<16x128xf32, #tpu.memory_space<vmem>>, vector<16x128xf32>
    %c0_6 = arith.constant 0 : index
    %c0_7 = arith.constant 0 : index
    %4 = vector.load %arg3[%c0_6, %c0_7] : memref<256x256xf32, #tpu.memory_space<vmem>>, vector<256x256xf32>
    %cst = arith.constant dense<0.000000e+00> : vector<16x256xf32>
    %5 = tpu.matmul %1, %4, %cst {dimension_numbers = #tpu.dot_dimension_numbers<[1], [0], [0], [1], [0, 0, 1, 1], [], []>} : vector<16x256xf32>, vector<256x256xf32>, vector<16x256xf32> -> vector<16x256xf32>
    %c0_8 = arith.constant 0 : index
    %c0_9 = arith.constant 0 : index
    %6 = vector.load %arg4[%c0_8, %c0_9] : memref<256x128xf32, #tpu.memory_space<vmem>>, vector<256x128xf32>
    %cst_10 = arith.constant dense<0.000000e+00> : vector<16x128xf32>
    %7 = tpu.matmul %1, %6, %cst_10 {dimension_numbers = #tpu.dot_dimension_numbers<[1], [0], [0], [1], [0, 0, 1, 1], [], []>} : vector<16x256xf32>, vector<256x128xf32>, vector<16x128xf32> -> vector<16x128xf32>
    %c0_11 = arith.constant 0 : index
    %c0_12 = arith.constant 0 : index
    %8 = vector.load %arg5[%c0_11, %c0_12] : memref<256x128xf32, #tpu.memory_space<vmem>>, vector<256x128xf32>
    %cst_13 = arith.constant dense<0.000000e+00> : vector<16x128xf32>
    %9 = tpu.matmul %1, %8, %cst_13 {dimension_numbers = #tpu.dot_dimension_numbers<[1], [0], [0], [1], [0, 0, 1, 1], [], []>} : vector<16x256xf32>, vector<256x128xf32>, vector<16x128xf32> -> vector<16x128xf32>
    %10 = vector.extract_strided_slice %5 {offsets = [0, 0], sizes = [16, 128], strides = [1, 1]} : vector<16x256xf32> to vector<16x128xf32>
    %11 = arith.mulf %10, %2 : vector<16x128xf32>
    %c64_i32 = arith.constant 64 : i32
    %12 = tpu.dynamic_rotate %10 by %c64_i32 dim 1 : vector<16x128xf32>, i32 -> vector<16x128xf32>
    %13 = arith.mulf %12, %3 : vector<16x128xf32>
    %14 = arith.addf %11, %13 : vector<16x128xf32>
    %c0_14 = arith.constant 0 : index
    %c0_15 = arith.constant 0 : index
    %c0_16 = arith.constant 0 : index
    %c0_17 = arith.constant 0 : index
    %15 = vector.load %arg8[%c0_14, %c0_15, %c0_16, %c0_17] : memref<1x2x16x128xf32, #tpu.memory_space<vmem>>, vector<1x1x16x128xf32>
    %16 = vector.shape_cast %15 : vector<1x1x16x128xf32> to vector<16x128xf32>
    %17 = vector.shape_cast %14 : vector<16x128xf32> to vector<1x1x16x128xf32>
    tpu.vector_store %arg8[%c0_14, %c0_15, %c0_16, %c0_17], %17 {strides = array<i32>} : memref<1x2x16x128xf32, #tpu.memory_space<vmem>>, vector<1x1x16x128xf32>,
    %18 = vector.extract_strided_slice %5 {offsets = [0, 128], sizes = [16, 128], strides = [1, 1]} : vector<16x256xf32> to vector<16x128xf32>
    %19 = arith.mulf %18, %2 : vector<16x128xf32>
    %c64_i32_18 = arith.constant 64 : i32
    %20 = tpu.dynamic_rotate %18 by %c64_i32_18 dim 1 : vector<16x128xf32>, i32 -> vector<16x128xf32>
    %21 = arith.mulf %20, %3 : vector<16x128xf32>
    %22 = arith.addf %19, %21 : vector<16x128xf32>
    %c0_19 = arith.constant 0 : index
    %c1 = arith.constant 1 : index
    %c0_20 = arith.constant 0 : index
    %c0_21 = arith.constant 0 : index
    %23 = vector.load %arg8[%c0_19, %c1, %c0_20, %c0_21] : memref<1x2x16x128xf32, #tpu.memory_space<vmem>>, vector<1x1x16x128xf32>
    %24 = vector.shape_cast %23 : vector<1x1x16x128xf32> to vector<16x128xf32>
    %25 = vector.shape_cast %22 : vector<16x128xf32> to vector<1x1x16x128xf32>
    tpu.vector_store %arg8[%c0_19, %c1, %c0_20, %c0_21], %25 {strides = array<i32>} : memref<1x2x16x128xf32, #tpu.memory_space<vmem>>, vector<1x1x16x128xf32>,
    %26 = arith.mulf %7, %2 : vector<16x128xf32>
    %c64_i32_22 = arith.constant 64 : i32
    %27 = tpu.dynamic_rotate %7 by %c64_i32_22 dim 1 : vector<16x128xf32>, i32 -> vector<16x128xf32>
    %28 = arith.mulf %27, %3 : vector<16x128xf32>
    %29 = arith.addf %26, %28 : vector<16x128xf32>
    %c0_23 = arith.constant 0 : index
    %c0_24 = arith.constant 0 : index
    %c0_25 = arith.constant 0 : index
    %c0_26 = arith.constant 0 : index
    %30 = vector.load %arg9[%c0_23, %c0_24, %c0_25, %c0_26] : memref<1x1x16x128xf32, #tpu.memory_space<vmem>>, vector<1x1x16x128xf32>
    %31 = vector.shape_cast %30 : vector<1x1x16x128xf32> to vector<16x128xf32>
    %32 = vector.shape_cast %29 : vector<16x128xf32> to vector<1x1x16x128xf32>
    tpu.vector_store %arg9[%c0_23, %c0_24, %c0_25, %c0_26], %32 {strides = array<i32>} : memref<1x1x16x128xf32, #tpu.memory_space<vmem>>, vector<1x1x16x128xf32>,
    %c0_27 = arith.constant 0 : index
    %c0_28 = arith.constant 0 : index
    %c0_29 = arith.constant 0 : index
    %c0_30 = arith.constant 0 : index
    %33 = vector.load %arg10[%c0_27, %c0_28, %c0_29, %c0_30] : memref<1x1x16x128xf32, #tpu.memory_space<vmem>>, vector<1x1x16x128xf32>
    %34 = vector.shape_cast %33 : vector<1x1x16x128xf32> to vector<16x128xf32>
    %35 = vector.shape_cast %9 : vector<16x128xf32> to vector<1x1x16x128xf32>
    tpu.vector_store %arg10[%c0_27, %c0_28, %c0_29, %c0_30], %35 {strides = array<i32>} : memref<1x1x16x128xf32, #tpu.memory_space<vmem>>, vector<1x1x16x128xf32>,
    return
  }
  func.func @transform_0(%arg0: i32, %arg1: i32) -> (i32, i32, i32) {
    %c0_i32 = arith.constant 0 : i32
    %c0_i32_0 = arith.constant 0 : i32
    return %arg0, %arg1, %c0_i32 : i32, i32, i32
  }
  func.func @transform_1(%arg0: i32, %arg1: i32) -> (i32, i32) {
    %c0_i32 = arith.constant 0 : i32
    %c0_i32_0 = arith.constant 0 : i32
    %c0_i32_1 = arith.constant 0 : i32
    return %c0_i32, %c0_i32_0 : i32, i32
  }
  func.func @transform_2(%arg0: i32, %arg1: i32) -> (i32, i32) {
    %c0_i32 = arith.constant 0 : i32
    %c0_i32_0 = arith.constant 0 : i32
    %c0_i32_1 = arith.constant 0 : i32
    return %c0_i32, %c0_i32_0 : i32, i32
  }
  func.func @transform_3(%arg0: i32, %arg1: i32) -> (i32, i32) {
    %c0_i32 = arith.constant 0 : i32
    %c0_i32_0 = arith.constant 0 : i32
    %c0_i32_1 = arith.constant 0 : i32
    return %c0_i32, %c0_i32_0 : i32, i32
  }
  func.func @transform_4(%arg0: i32, %arg1: i32) -> (i32, i32) {
    %c0_i32 = arith.constant 0 : i32
    %c0_i32_0 = arith.constant 0 : i32
    return %arg1, %c0_i32 : i32, i32
  }
  func.func @transform_5(%arg0: i32, %arg1: i32) -> (i32, i32) {
    %c0_i32 = arith.constant 0 : i32
    %c0_i32_0 = arith.constant 0 : i32
    return %arg1, %c0_i32 : i32, i32
  }
  func.func @transform_6(%arg0: i32, %arg1: i32) -> (i32, i32, i32, i32) {
    %c0_i32 = arith.constant 0 : i32
    %c0_i32_0 = arith.constant 0 : i32
    %c0_i32_1 = arith.constant 0 : i32
    return %arg0, %c0_i32, %arg1, %c0_i32_0 : i32, i32, i32, i32
  }
  func.func @transform_7(%arg0: i32, %arg1: i32) -> (i32, i32, i32, i32) {
    %c0_i32 = arith.constant 0 : i32
    %c0_i32_0 = arith.constant 0 : i32
    %c0_i32_1 = arith.constant 0 : i32
    return %arg0, %c0_i32, %arg1, %c0_i32_0 : i32, i32, i32, i32
  }
  func.func @transform_8(%arg0: i32, %arg1: i32) -> (i32, i32, i32, i32) {
    %c0_i32 = arith.constant 0 : i32
    %c0_i32_0 = arith.constant 0 : i32
    %c0_i32_1 = arith.constant 0 : i32
    return %arg0, %c0_i32, %arg1, %c0_i32_0 : i32, i32, i32, i32
  }
}

</mosaic_0001>

<llo_original>
// kernel: tpu_custom_call.1
$region0: #{tpu_custom_call.1}
  #allocation0 [shape = 'u32[]', space=smem, size = 0x4, offset = 0x4, fixed_abs, tag = 'smem constant byte address 0x4 - core index']
  #allocation1 [shape = 'u32[144,128]{1,0:T(1,128)}', space=vmem, size = 0x12000, scoped, tag = 'internal scratch']
  #allocation16 [shape = 's32[]', space=sflag, size = 0x4, offset = 0, fixed_abs, tag = 'sflag constant byte address 0x0 - dummy sync flag']
  %s0 = inlined_call_operand.hbm [shape: f32[2,32,256], index: 0, kind: input, shape index: {}]
  %s1 = inlined_call_operand.hbm [shape: f32[256,256], index: 1, kind: input, shape index: {}]
  %s2 = inlined_call_operand.hbm [shape: f32[256,128], index: 2, kind: input, shape index: {}]
  %s3 = inlined_call_operand.hbm [shape: f32[256,128], index: 3, kind: input, shape index: {}]
  %s4 = inlined_call_operand.hbm [shape: f32[32,128], index: 4, kind: input, shape index: {}]
  %s5 = inlined_call_operand.hbm [shape: f32[32,128], index: 5, kind: input, shape index: {}]
  %s6 = inlined_call_operand.hbm [shape: f32[2,2,32,128], index: 6, kind: output, shape index: {0}]
  %s7 = inlined_call_operand.hbm [shape: f32[2,1,32,128], index: 7, kind: output, shape index: {1}]
  %s8 = inlined_call_operand.hbm [shape: f32[2,1,32,128], index: 8, kind: output, shape index: {2}]
  %9 = xla_tuple %s6, %s7, %s8
  %s10 = sld [smem:[#allocation0]]
  $region97: #{tpu_custom_call.1} parent=0
    _
  %s12 = ssub.s32 1, %s10
  %s13 = scalar_select 0, %s12, %s10
  $region1: #{tpu_custom_call.1} parent=0
    #allocation2 [shape = 'u8[32768]{0}', space=vmem, size = 0x8000, scoped, tag = 'input window, operand 0']
    #allocation3 [shape = 's32[2]{0}', space=sflag, size = 0x8, scoped, tag = 'scoped memory for tpu_custom_call.1']
    #allocation4 [shape = 's32[2]{0}', space=sflag, size = 0x8, scoped, tag = 'scoped memory for tpu_custom_call.1']
    #allocation5 [shape = 'u8[262144]{0}', space=vmem, size = 0x40000, scoped, tag = 'input window, operand 1, single buffered']
    #allocation6 [shape = 's32[1]{0}', space=sflag, size = 0x4, scoped, tag = 'scoped memory for tpu_custom_call.1']
    #allocation7 [shape = 'u8[131072]{0}', space=vmem, size = 0x20000, scoped, tag = 'input window, operand 2, single buffered']
    #allocation8 [shape = 'u8[131072]{0}', space=vmem, size = 0x20000, scoped, tag = 'input window, operand 3, single buffered']
    #allocation9 [shape = 's32[1]{0}', space=sflag, size = 0x4, scoped, tag = 'scoped memory for tpu_custom_call.1']
    #allocation10 [shape = 'u8[16384]{0}', space=vmem, size = 0x4000, scoped, tag = 'input window, operand 4']
    #allocation11 [shape = 'u8[16384]{0}', space=vmem, size = 0x4000, scoped, tag = 'input window, operand 5']
    #allocation12 [shape = 'u8[32768]{0}', space=vmem, size = 0x8000, scoped, tag = 'output window, operand 0']
    #allocation13 [shape = 'u8[16384]{0}', space=vmem, size = 0x4000, scoped, tag = 'output window, operand 1']
    #allocation14 [shape = 's32[2]{0}', space=sflag, size = 0x8, scoped, tag = 'scoped memory for tpu_custom_call.1']
    #allocation15 [shape = 'u8[16384]{0}', space=vmem, size = 0x4000, scoped, tag = 'output window, operand 2']
    %14 = vsyncpa [#allocation3], 0
    %s15 = scalar_lea.sflag [#allocation3], 1
    %16 = vsyncpa %s15, 0
    %17 = vsyncpa [#allocation6], 0
    %18 = vsyncpa [#allocation9], 0
    %19 = vsyncpa [#allocation4], 0
    %s20 = scalar_lea.sflag [#allocation4], 1
    %21 = vsyncpa %s20, 0
    %22 = vsyncpa [#allocation14], 0
    %s23 = scalar_lea.sflag [#allocation14], 1
    %24 = vsyncpa %s23, 0
    loop: start=0, step=1, limit=6
    $region2: #{tpu_custom_call.1} parent=1 // loop_pre_header
      _
    $region3: #{tpu_custom_call.1} parent=1 // loop_header
      %s26 = sphi 0, %s30
      %p27 = scmp.ge.s32.totalorder %s26, 6
      %s33 = sphi 0, %s45
      %s34 = sphi 0, %s41
      %s35 = sphi 0, %s33
      %s36 = sphi 0, %s34
      %s37 = sphi 0, %s35
      %s38 = sphi 0, %s36
      %s50 = sphi 0, %s52
      %s53 = sphi 0, %s50
      %s54 = sphi 0, %s53
      %s70 = sphi 0, %s54
      %s74 = sphi 0, %s74
      %s76 = sphi 0, %s74
      %s77 = sphi 0, %s76
      %s91 = sphi 0, %s77
      %s95 = sphi 0, %s95
      %s97 = sphi 0, %s95
      %s98 = sphi 0, %s97
      %s112 = sphi 0, %s98
      %s116 = sphi 0, %s116
      %s118 = sphi 0, %s116
      %s119 = sphi 0, %s118
      %s133 = sphi 0, %s119
      %s139 = sphi 0, %s141
      %s142 = sphi 0, %s139
      %s143 = sphi 0, %s142
      %s159 = sphi 0, %s143
      %s165 = sphi 0, %s167
      %s168 = sphi 0, %s165
      %s169 = sphi 0, %s168
      %s185 = sphi 0, %s169
      %s193 = sphi 0, %s195
      %s196 = sphi 0, %s193
      %s197 = sphi 0, %s196
      %s213 = sphi 0, %s197
      %s221 = sphi 0, %s223
      %s224 = sphi 0, %s221
      %s225 = sphi 0, %s224
      %s241 = sphi 0, %s225
      %s249 = sphi 0, %s251
      %s252 = sphi 0, %s249
      %s253 = sphi 0, %s252
      %s269 = sphi 0, %s253
    $region4: #{tpu_custom_call.1} parent=1 // loop_header_branch
      %29 = sbr.rel (%p27) target = $region8
    $region5: #{tpu_custom_call.1} parent=1 // loop_body
      %s31 = ssub.s32 %s26, 1
      %s32 = ssub.s32 %s26, 2
      %s39 = sadd.s32 1, %s34
      %p40 = scmp.ge.s32.totalorder %s39, 2
      %s41 = scalar_select %p40, 0, %s39
      %s42 = sadd.s32 1, %s33
      %s43 = scalar_select %p40, %s42, %s33
      %p44 = scmp.ge.s32.totalorder %s43, 2
      %s45 = scalar_select %p44, 0, %s43
      %s46 = ssub.s32 %s33, %s45
      %s47 = ssub.s32 %s34, %s41
      %s48 = sor.u32 %s46, %s47
      %p49 = scmp.eq.s32.totalorder %s48, 0
      %s51 = sadd.s32 %s50, 1
      %s52 = scalar_select %p49, %s50, %s51
      %p55 = pneg %p49
      %p56 = scmp.eq.s32.totalorder %s26, 3
      %p57 = por %p55, %p56
      %p58 = scmp.ne.s32.totalorder %s50, %s53
      %p59 = scmp.eq.s32.totalorder %s26, 0
      %p60 = por %p58, %p59
      %p61 = scmp.ne.s32.totalorder %s50, %s53
      %p62 = scmp.eq.s32.totalorder %s31, 3
      %p63 = por %p61, %p62
      %p64 = scmp.ne.s32.totalorder %s53, %s54
      %p65 = scmp.eq.s32.totalorder %s31, 0
      %p66 = por %p64, %p65
      %p67 = scmp.ne.s32.totalorder %s53, %s54
      %p68 = scmp.eq.s32.totalorder %s32, 3
      %p69 = por %p67, %p68
      %p71 = scmp.ne.s32.totalorder %s54, %s70
      %p72 = scmp.eq.s32.totalorder %s32, 0
      %p73 = por %p71, %p72
      %s75 = sadd.s32 %s74, 1
      %p78 = scmp.eq.s32.totalorder %s26, 3
      %p79 = scmp.ne.s32.totalorder %s74, %s76
      %p80 = scmp.eq.s32.totalorder %s26, 0
      %p81 = por %p79, %p80
      %p82 = scmp.ne.s32.totalorder %s74, %s76
      %p83 = scmp.eq.s32.totalorder %s31, 3
      %p84 = por %p82, %p83
      %p85 = scmp.ne.s32.totalorder %s76, %s77
      %p86 = scmp.eq.s32.totalorder %s31, 0
      %p87 = por %p85, %p86
      %p88 = scmp.ne.s32.totalorder %s76, %s77
      %p89 = scmp.eq.s32.totalorder %s32, 3
      %p90 = por %p88, %p89
      %p92 = scmp.ne.s32.totalorder %s77, %s91
      %p93 = scmp.eq.s32.totalorder %s32, 0
      %p94 = por %p92, %p93
      %s96 = sadd.s32 %s95, 1
      %p99 = scmp.eq.s32.totalorder %s26, 3
      %p100 = scmp.ne.s32.totalorder %s95, %s97
      %p101 = scmp.eq.s32.totalorder %s26, 0
      %p102 = por %p100, %p101
      %p103 = scmp.ne.s32.totalorder %s95, %s97
      %p104 = scmp.eq.s32.totalorder %s31, 3
      %p105 = por %p103, %p104
      %p106 = scmp.ne.s32.totalorder %s97, %s98
      %p107 = scmp.eq.s32.totalorder %s31, 0
      %p108 = por %p106, %p107
      %p109 = scmp.ne.s32.totalorder %s97, %s98
      %p110 = scmp.eq.s32.totalorder %s32, 3
      %p111 = por %p109, %p110
      %p113 = scmp.ne.s32.totalorder %s98, %s112
      %p114 = scmp.eq.s32.totalorder %s32, 0
      %p115 = por %p113, %p114
      %s117 = sadd.s32 %s116, 1
      %p120 = scmp.eq.s32.totalorder %s26, 3
      %p121 = scmp.ne.s32.totalorder %s116, %s118
      %p122 = scmp.eq.s32.totalorder %s26, 0
      %p123 = por %p121, %p122
      %p124 = scmp.ne.s32.totalorder %s116, %s118
      %p125 = scmp.eq.s32.totalorder %s31, 3
      %p126 = por %p124, %p125
      %p127 = scmp.ne.s32.totalorder %s118, %s119
      %p128 = scmp.eq.s32.totalorder %s31, 0
      %p129 = por %p127, %p128
      %p130 = scmp.ne.s32.totalorder %s118, %s119
      %p131 = scmp.eq.s32.totalorder %s32, 3
      %p132 = por %p130, %p131
      %p134 = scmp.ne.s32.totalorder %s119, %s133
      %p135 = scmp.eq.s32.totalorder %s32, 0
      %p136 = por %p134, %p135
      %s137 = ssub.s32 %s34, %s41
      %p138 = scmp.eq.s32.totalorder %s137, 0
      %s140 = sadd.s32 %s139, 1
      %s141 = scalar_select %p138, %s139, %s140
      %p144 = pneg %p138
      %p145 = scmp.eq.s32.totalorder %s26, 3
      %p146 = por %p144, %p145
      %p147 = scmp.ne.s32.totalorder %s139, %s142
      %p148 = scmp.eq.s32.totalorder %s26, 0
      %p149 = por %p147, %p148
      %p150 = scmp.ne.s32.totalorder %s139, %s142
      %p151 = scmp.eq.s32.totalorder %s31, 3
      %p152 = por %p150, %p151
      %p153 = scmp.ne.s32.totalorder %s142, %s143
      %p154 = scmp.eq.s32.totalorder %s31, 0
      %p155 = por %p153, %p154
      %p156 = scmp.ne.s32.totalorder %s142, %s143
      %p157 = scmp.eq.s32.totalorder %s32, 3
      %p158 = por %p156, %p157
      %p160 = scmp.ne.s32.totalorder %s143, %s159
      %p161 = scmp.eq.s32.totalorder %s32, 0
      %p162 = por %p160, %p161
      %s163 = ssub.s32 %s34, %s41
      %p164 = scmp.eq.s32.totalorder %s163, 0
      %s166 = sadd.s32 %s165, 1
      %s167 = scalar_select %p164, %s165, %s166
      %p170 = pneg %p164
      %p171 = scmp.eq.s32.totalorder %s26, 3
      %p172 = por %p170, %p171
      %p173 = scmp.ne.s32.totalorder %s165, %s168
      %p174 = scmp.eq.s32.totalorder %s26, 0
      %p175 = por %p173, %p174
      %p176 = scmp.ne.s32.totalorder %s165, %s168
      %p177 = scmp.eq.s32.totalorder %s31, 3
      %p178 = por %p176, %p177
      %p179 = scmp.ne.s32.totalorder %s168, %s169
      %p180 = scmp.eq.s32.totalorder %s31, 0
      %p181 = por %p179, %p180
      %p182 = scmp.ne.s32.totalorder %s168, %s169
      %p183 = scmp.eq.s32.totalorder %s32, 3
      %p184 = por %p182, %p183
      %p186 = scmp.ne.s32.totalorder %s169, %s185
      %p187 = scmp.eq.s32.totalorder %s32, 0
      %p188 = por %p186, %p187
      %s189 = ssub.s32 %s33, %s45
      %s190 = ssub.s32 %s34, %s41
      %s191 = sor.u32 %s189, %s190
      %p192 = scmp.eq.s32.totalorder %s191, 0
      %s194 = sadd.s32 %s193, 1
      %s195 = scalar_select %p192, %s193, %s194
      %p198 = pneg %p192
      %p199 = scmp.eq.s32.totalorder %s26, 3
      %p200 = por %p198, %p199
      %p201 = scmp.ne.s32.totalorder %s193, %s196
      %p202 = scmp.eq.s32.totalorder %s26, 0
      %p203 = por %p201, %p202
      %p204 = scmp.ne.s32.totalorder %s193, %s196
      %p205 = scmp.eq.s32.totalorder %s31, 3
      %p206 = por %p204, %p205
      %p207 = scmp.ne.s32.totalorder %s196, %s197
      %p208 = scmp.eq.s32.totalorder %s31, 0
      %p209 = por %p207, %p208
      %p210 = scmp.ne.s32.totalorder %s196, %s197
      %p211 = scmp.eq.s32.totalorder %s32, 3
      %p212 = por %p210, %p211
      %p214 = scmp.ne.s32.totalorder %s197, %s213
      %p215 = scmp.eq.s32.totalorder %s32, 0
      %p216 = por %p214, %p215
      %s217 = ssub.s32 %s33, %s45
      %s218 = ssub.s32 %s34, %s41
      %s219 = sor.u32 %s217, %s218
      %p220 = scmp.eq.s32.totalorder %s219, 0
      %s222 = sadd.s32 %s221, 1
      %s223 = scalar_select %p220, %s221, %s222
      %p226 = pneg %p220
      %p227 = scmp.eq.s32.totalorder %s26, 3
      %p228 = por %p226, %p227
      %p229 = scmp.ne.s32.totalorder %s221, %s224
      %p230 = scmp.eq.s32.totalorder %s26, 0
      %p231 = por %p229, %p230
      %p232 = scmp.ne.s32.totalorder %s221, %s224
      %p233 = scmp.eq.s32.totalorder %s31, 3
      %p234 = por %p232, %p233
      %p235 = scmp.ne.s32.totalorder %s224, %s225
      %p236 = scmp.eq.s32.totalorder %s31, 0
      %p237 = por %p235, %p236
      %p238 = scmp.ne.s32.totalorder %s224, %s225
      %p239 = scmp.eq.s32.totalorder %s32, 3
      %p240 = por %p238, %p239
      %p242 = scmp.ne.s32.totalorder %s225, %s241
      %p243 = scmp.eq.s32.totalorder %s32, 0
      %p244 = por %p242, %p243
      %s245 = ssub.s32 %s33, %s45
      %s246 = ssub.s32 %s34, %s41
      %s247 = sor.u32 %s245, %s246
      %p248 = scmp.eq.s32.totalorder %s247, 0
      %s250 = sadd.s32 %s249, 1
      %s251 = scalar_select %p248, %s249, %s250
      %p254 = pneg %p248
      %p255 = scmp.eq.s32.totalorder %s26, 3
      %p256 = por %p254, %p255
      %p257 = scmp.ne.s32.totalorder %s249, %s252
      %p258 = scmp.eq.s32.totalorder %s26, 0
      %p259 = por %p257, %p258
      %p260 = scmp.ne.s32.totalorder %s249, %s252
      %p261 = scmp.eq.s32.totalorder %s31, 3
      %p262 = por %p260, %p261
      %p263 = scmp.ne.s32.totalorder %s252, %s253
      %p264 = scmp.eq.s32.totalorder %s31, 0
      %p265 = por %p263, %p264
      %p266 = scmp.ne.s32.totalorder %s252, %s253
      %p267 = scmp.eq.s32.totalorder %s32, 3
      %p268 = por %p266, %p267
      %p270 = scmp.ne.s32.totalorder %s253, %s269
      %p271 = scmp.eq.s32.totalorder %s32, 0
      %p272 = por %p270, %p271
      %p273 = scmp.le.s32.totalorder 1, %s26
      %p274 = scmp.lt.s32.totalorder %s26, 5
      %p275 = pnand %p273, %p274
      %p276 = pneg %p275
      // Predicated region
      $region9: #{tpu_custom_call.1} parent=5 // pred_check
        _
      $region10: #{tpu_custom_call.1} parent=5 // pred_check_branch
        %278 = sbr.rel (%p275) target = $region12
      $region11: #{tpu_custom_call.1} parent=5 // pred_region
        %s279 = ssub.s32 %s26, 1
        // Predicated region
        $region13: #{tpu_custom_call.1} parent=11 // pred_check
          %p280 = pneg %p87
        $region14: #{tpu_custom_call.1} parent=11 // pred_check_branch
          %282 = sbr.rel (%p280) target = $region16
        $region15: #{tpu_custom_call.1} parent=11 // pred_region
          %s284 = ssub.s32 8192, 8192
          %285 = vsyncadd [#allocation6], %s284
          %s286 = sshll.u32 [#allocation5], 4
          %s287 = int_to_ptr.vmem [resolvable:$true] %s286
          %292 = dma.hbm_to_vmem [thread:$0]  %s1, 8192, %s287, [#allocation6], 256, 256, 16
        $region16: #{tpu_custom_call.1} parent=11 // pred_fallthru
          _
        // Predicated region
        $region17: #{tpu_custom_call.1} parent=11 // pred_check
          %p293 = pneg %p108
        $region18: #{tpu_custom_call.1} parent=11 // pred_check_branch
          %295 = sbr.rel (%p293) target = $region20
        $region19: #{tpu_custom_call.1} parent=11 // pred_region
          %s297 = ssub.s32 4096, 4096
          %298 = vsyncadd [#allocation6], %s297
          %s299 = sshll.u32 [#allocation7], 4
          %s300 = int_to_ptr.vmem [resolvable:$true] %s299
          %305 = dma.hbm_to_vmem [thread:$0]  %s2, 4096, %s300, [#allocation6], 128, 128, 8
        $region20: #{tpu_custom_call.1} parent=11 // pred_fallthru
          _
        // Predicated region
        $region21: #{tpu_custom_call.1} parent=11 // pred_check
          %p306 = pneg %p129
        $region22: #{tpu_custom_call.1} parent=11 // pred_check_branch
          %308 = sbr.rel (%p306) target = $region24
        $region23: #{tpu_custom_call.1} parent=11 // pred_region
          %s310 = ssub.s32 4096, 4096
          %311 = vsyncadd [#allocation9], %s310
          %s312 = sshll.u32 [#allocation8], 4
          %s313 = int_to_ptr.vmem [resolvable:$true] %s312
          %318 = dma.hbm_to_vmem [thread:$0]  %s3, 4096, %s313, [#allocation9], 128, 128, 8
        $region24: #{tpu_custom_call.1} parent=11 // pred_fallthru
          _
      $region12: #{tpu_custom_call.1} parent=5 // pred_fallthru
        _
      %p319 = scmp.lt.s32.totalorder %s26, 4
      // Predicated region
      $region25: #{tpu_custom_call.1} parent=5 // pred_check
        %p320 = pneg %p319
      $region26: #{tpu_custom_call.1} parent=5 // pred_check_branch
        %322 = sbr.rel (%p320) target = $region28
      $region27: #{tpu_custom_call.1} parent=5 // pred_region
        // Predicated region
        $region29: #{tpu_custom_call.1} parent=27 // pred_check
          %p323 = pneg %p60
        $region30: #{tpu_custom_call.1} parent=27 // pred_check_branch
          %325 = sbr.rel (%p323) target = $region32
        $region31: #{tpu_custom_call.1} parent=27 // pred_region
          %s326 = sand.u32 %s26, 1
          %s327 = scalar_lea.sflag [#allocation3], %s326
          %s328 = sand.u32 %s50, 1
          %s329 = smul.addr %s328, 32
          %s330 = scalar_lea.vmem [#allocation2], %s329
          %s331 = smul.u32 2, %s34
          %s333 = ssub.s32 512, 512
          %334 = vsyncadd %s327, %s333
          %s335 = smul.addr %s331, 2
          %s336 = smul.addr %s33, 8
          %s337 = sadd.s32 %s335, %s336
          %s338 = smul.addr %s337, 128
          %s339 = scalar_lea.hbm %s0, %s338
          %s340 = sshll.u32 %s330, 4
          %s341 = int_to_ptr.vmem [resolvable:$true] %s340
          %346 = dma.hbm_to_vmem [thread:$0]  %s339, 512, %s341, %s327, 256, 256, 16
        $region32: #{tpu_custom_call.1} parent=27 // pred_fallthru
          _
        // Predicated region
        $region33: #{tpu_custom_call.1} parent=27 // pred_check
          %p347 = pneg %p149
        $region34: #{tpu_custom_call.1} parent=27 // pred_check_branch
          %349 = sbr.rel (%p347) target = $region36
        $region35: #{tpu_custom_call.1} parent=27 // pred_region
          %s350 = sand.u32 %s26, 1
          %s351 = scalar_lea.sflag [#allocation3], %s350
          %s352 = sand.u32 %s139, 1
          %s353 = smul.addr %s352, 16
          %s354 = scalar_lea.vmem [#allocation10], %s353
          %s355 = smul.u32 2, %s34
          %s357 = ssub.s32 256, 256
          %358 = vsyncadd %s351, %s357
          %s359 = smul.addr %s355, 128
          %s360 = scalar_lea.hbm %s4, %s359
          %s361 = sshll.u32 %s354, 4
          %s362 = int_to_ptr.vmem [resolvable:$true] %s361
          %367 = dma.hbm_to_vmem [thread:$0]  %s360, 256, %s362, %s351, 128, 128, 8
        $region36: #{tpu_custom_call.1} parent=27 // pred_fallthru
          _
        // Predicated region
        $region37: #{tpu_custom_call.1} parent=27 // pred_check
          %p368 = pneg %p175
        $region38: #{tpu_custom_call.1} parent=27 // pred_check_branch
          %370 = sbr.rel (%p368) target = $region40
        $region39: #{tpu_custom_call.1} parent=27 // pred_region
          %s371 = sand.u32 %s26, 1
          %s372 = scalar_lea.sflag [#allocation3], %s371
          %s373 = sand.u32 %s165, 1
          %s374 = smul.addr %s373, 16
          %s375 = scalar_lea.vmem [#allocation11], %s374
          %s376 = smul.u32 2, %s34
          %s378 = ssub.s32 256, 256
          %379 = vsyncadd %s372, %s378
          %s380 = smul.addr %s376, 128
          %s381 = scalar_lea.hbm %s5, %s380
          %s382 = sshll.u32 %s375, 4
          %s383 = int_to_ptr.vmem [resolvable:$true] %s382
          %388 = dma.hbm_to_vmem [thread:$0]  %s381, 256, %s383, %s372, 128, 128, 8
        $region40: #{tpu_custom_call.1} parent=27 // pred_fallthru
          _
      $region28: #{tpu_custom_call.1} parent=5 // pred_fallthru
        _
      %p389 = scmp.le.s32.totalorder 1, %s26
      %p390 = scmp.lt.s32.totalorder %s26, 5
      %p391 = pnand %p389, %p390
      %p392 = pneg %p391
      // Predicated region
      $region41: #{tpu_custom_call.1} parent=5 // pred_check
        _
      $region42: #{tpu_custom_call.1} parent=5 // pred_check_branch
        %394 = sbr.rel (%p391) target = $region44
      $region43: #{tpu_custom_call.1} parent=5 // pred_region
        %s395 = ssub.s32 %s26, 1
        %s396 = sand.u32 %s31, 1
        %s397 = scalar_lea.sflag [#allocation3], %s396
        %s398 = sand.u32 %s53, 1
        %s399 = smul.addr %s398, 32
        %s400 = scalar_lea.vmem [#allocation2], %s399
        // Predicated region
        $region45: #{tpu_custom_call.1} parent=43 // pred_check
          %p401 = pneg %p66
        $region46: #{tpu_custom_call.1} parent=43 // pred_check_branch
          %403 = sbr.rel (%p401) target = $region48
        $region47: #{tpu_custom_call.1} parent=43 // pred_region
          %404 = dma.done %s397, 512
        $region48: #{tpu_custom_call.1} parent=43 // pred_fallthru
          _
        // Predicated region
        $region49: #{tpu_custom_call.1} parent=43 // pred_check
          %p405 = pneg %p87
        $region50: #{tpu_custom_call.1} parent=43 // pred_check_branch
          %407 = sbr.rel (%p405) target = $region52
        $region51: #{tpu_custom_call.1} parent=43 // pred_region
          %408 = dma.done [#allocation6], 8192
        $region52: #{tpu_custom_call.1} parent=43 // pred_fallthru
          _
        // Predicated region
        $region53: #{tpu_custom_call.1} parent=43 // pred_check
          %p409 = pneg %p108
        $region54: #{tpu_custom_call.1} parent=43 // pred_check_branch
          %411 = sbr.rel (%p409) target = $region56
        $region55: #{tpu_custom_call.1} parent=43 // pred_region
          %412 = dma.done [#allocation6], 4096
        $region56: #{tpu_custom_call.1} parent=43 // pred_fallthru
          _
        // Predicated region
        $region57: #{tpu_custom_call.1} parent=43 // pred_check
          %p413 = pneg %p129
        $region58: #{tpu_custom_call.1} parent=43 // pred_check_branch
          %415 = sbr.rel (%p413) target = $region60
        $region59: #{tpu_custom_call.1} parent=43 // pred_region
          %416 = dma.done [#allocation9], 4096
        $region60: #{tpu_custom_call.1} parent=43 // pred_fallthru
          _
        %s417 = sand.u32 %s31, 1
        %s418 = scalar_lea.sflag [#allocation3], %s417
        %s419 = sand.u32 %s142, 1
        %s420 = smul.addr %s419, 16
        %s421 = scalar_lea.vmem [#allocation10], %s420
        // Predicated region
        $region61: #{tpu_custom_call.1} parent=43 // pred_check
          %p422 = pneg %p155
        $region62: #{tpu_custom_call.1} parent=43 // pred_check_branch
          %424 = sbr.rel (%p422) target = $region64
        $region63: #{tpu_custom_call.1} parent=43 // pred_region
          %425 = dma.done %s418, 256
        $region64: #{tpu_custom_call.1} parent=43 // pred_fallthru
          _
        %s426 = sand.u32 %s31, 1
        %s427 = scalar_lea.sflag [#allocation3], %s426
        %s428 = sand.u32 %s168, 1
        %s429 = smul.addr %s428, 16
        %s430 = scalar_lea.vmem [#allocation11], %s429
        // Predicated region
        $region65: #{tpu_custom_call.1} parent=43 // pred_check
          %p431 = pneg %p181
        $region66: #{tpu_custom_call.1} parent=43 // pred_check_branch
          %433 = sbr.rel (%p431) target = $region68
        $region67: #{tpu_custom_call.1} parent=43 // pred_region
          %434 = dma.done %s427, 256
        $region68: #{tpu_custom_call.1} parent=43 // pred_fallthru
          _
        %s435 = sand.u32 %s31, 1
        %s436 = scalar_lea.sflag [#allocation3], %s435
        %s437 = sand.u32 %s53, 1
        %s438 = smul.addr %s437, 32
        %s439 = scalar_lea.vmem [#allocation2], %s438
        %p440 = pneg %p66
        %p441 = pneg %p63
        %p442 = pneg %p87
        %p443 = pneg %p84
        %p444 = pneg %p108
        %p445 = pneg %p105
        %p446 = pneg %p129
        %p447 = pneg %p126
        %s448 = sand.u32 %s31, 1
        %s449 = scalar_lea.sflag [#allocation3], %s448
        %s450 = sand.u32 %s142, 1
        %s451 = smul.addr %s450, 16
        %s452 = scalar_lea.vmem [#allocation10], %s451
        %p453 = pneg %p155
        %p454 = pneg %p152
        %s455 = sand.u32 %s31, 1
        %s456 = scalar_lea.sflag [#allocation3], %s455
        %s457 = sand.u32 %s168, 1
        %s458 = smul.addr %s457, 16
        %s459 = scalar_lea.vmem [#allocation11], %s458
        %p460 = pneg %p181
        %p461 = pneg %p178
        %p462 = pneg %p209
        %p463 = pneg %p206
        %s464 = sand.u32 %s196, 1
        %s465 = scalar_lea.sflag [#allocation4], %s464
        %s466 = sand.u32 %s196, 1
        %s467 = smul.addr %s466, 32
        %s468 = scalar_lea.vmem [#allocation12], %s467
        %p469 = pneg %p237
        %p470 = pneg %p234
        %s471 = sand.u32 %s31, 1
        %s472 = scalar_lea.sflag [#allocation14], %s471
        %s473 = sand.u32 %s224, 1
        %s474 = smul.addr %s473, 16
        %s475 = scalar_lea.vmem [#allocation13], %s474
        %p476 = pneg %p265
        %p477 = pneg %p262
        %s478 = sand.u32 %s31, 1
        %s479 = scalar_lea.sflag [#allocation14], %s478
        %s480 = sand.u32 %s252, 1
        %s481 = smul.addr %s480, 16
        %s482 = scalar_lea.vmem [#allocation15], %s481
        %s483 = smul.u32 2, %s36
        %s484 = smul.u32 2, %s36
        %s485 = smul.u32 2, %s36
        %s486 = smul.u32 2, %s36
        %s487 = smul.u32 2, %s36
        %s488 = smul.u32 2, %s36
        %v489 = vld [vmem:[%s400] sm:$0xff]
        %v490 = vld [vmem:[%s400 + $0x8] sm:$0xff]
        %v491 = vld [vmem:[%s400 + $0x10] sm:$0xff]
        %v492 = vld [vmem:[%s400 + $0x18] sm:$0xff]
        %v493 = vld [vmem:[%s421] sm:$0xff]
        %v494 = vld [vmem:[%s421 + $0x8] sm:$0xff]
        %v495 = vld [vmem:[%s430] sm:$0xff]
        %v496 = vld [vmem:[%s430 + $0x8] sm:$0xff]
        %v497 = vld [vmem:[#allocation5] sm:$0xff]
        %v498 = vld [vmem:[#allocation5 + $0x8] sm:$0xff]
        %v499 = vld [vmem:[#allocation5 + $0x10] sm:$0xff]
        %v500 = vld [vmem:[#allocation5 + $0x18] sm:$0xff]
        %v501 = vld [vmem:[#allocation5 + $0x20] sm:$0xff]
        %v502 = vld [vmem:[#allocation5 + $0x28] sm:$0xff]
        %v503 = vld [vmem:[#allocation5 + $0x30] sm:$0xff]
        %v504 = vld [vmem:[#allocation5 + $0x38] sm:$0xff]
        %v505 = vld [vmem:[#allocation5 + $0x40] sm:$0xff]
        %v506 = vld [vmem:[#allocation5 + $0x48] sm:$0xff]
        %v507 = vld [vmem:[#allocation5 + $0x50] sm:$0xff]
        %v508 = vld [vmem:[#allocation5 + $0x58] sm:$0xff]
        %v509 = vld [vmem:[#allocation5 + $0x60] sm:$0xff]
        %v510 = vld [vmem:[#allocation5 + $0x68] sm:$0xff]
        %v511 = vld [vmem:[#allocation5 + $0x70] sm:$0xff]
        %v512 = vld [vmem:[#allocation5 + $0x78] sm:$0xff]
        %v513 = vld [vmem:[#allocation5 + $0x80] sm:$0xff]
        %v514 = vld [vmem:[#allocation5 + $0x88] sm:$0xff]
        %v515 = vld [vmem:[#allocation5 + $0x90] sm:$0xff]
        %v516 = vld [vmem:[#allocation5 + $0x98] sm:$0xff]
        %v517 = vld [vmem:[#allocation5 + $0xa0] sm:$0xff]
        %v518 = vld [vmem:[#allocation5 + $0xa8] sm:$0xff]
        %v519 = vld [vmem:[#allocation5 + $0xb0] sm:$0xff]
        %v520 = vld [vmem:[#allocation5 + $0xb8] sm:$0xff]
        %v521 = vld [vmem:[#allocation5 + $0xc0] sm:$0xff]
        %v522 = vld [vmem:[#allocation5 + $0xc8] sm:$0xff]
        %v523 = vld [vmem:[#allocation5 + $0xd0] sm:$0xff]
        %v524 = vld [vmem:[#allocation5 + $0xd8] sm:$0xff]
        %v525 = vld [vmem:[#allocation5 + $0xe0] sm:$0xff]
        %v526 = vld [vmem:[#allocation5 + $0xe8] sm:$0xff]
        %v527 = vld [vmem:[#allocation5 + $0xf0] sm:$0xff]
        %v528 = vld [vmem:[#allocation5 + $0xf8] sm:$0xff]
        %v529 = vld [vmem:[#allocation5 + $0x100] sm:$0xff]
        %v530 = vld [vmem:[#allocation5 + $0x108] sm:$0xff]
        %v531 = vld [vmem:[#allocation5 + $0x110] sm:$0xff]
        %v532 = vld [vmem:[#allocation5 + $0x118] sm:$0xff]
        %v533 = vld [vmem:[#allocation5 + $0x120] sm:$0xff]
        %v534 = vld [vmem:[#allocation5 + $0x128] sm:$0xff]
        %v535 = vld [vmem:[#allocation5 + $0x130] sm:$0xff]
        %v536 = vld [vmem:[#allocation5 + $0x138] sm:$0xff]
        %v537 = vld [vmem:[#allocation5 + $0x140] sm:$0xff]
        %v538 = vld [vmem:[#allocation5 + $0x148] sm:$0xff]
        %v539 = vld [vmem:[#allocation5 + $0x150] sm:$0xff]
        %v540 = vld [vmem:[#allocation5 + $0x158] sm:$0xff]
        %v541 = vld [vmem:[#allocation5 + $0x160] sm:$0xff]
        %v542 = vld [vmem:[#allocation5 + $0x168] sm:$0xff]
        %v543 = vld [vmem:[#allocation5 + $0x170] sm:$0xff]
        %v544 = vld [vmem:[#allocation5 + $0x178] sm:$0xff]
        %v545 = vld [vmem:[#allocation5 + $0x180] sm:$0xff]
        %v546 = vld [vmem:[#allocation5 + $0x188] sm:$0xff]
        %v547 = vld [vmem:[#allocation5 + $0x190] sm:$0xff]
        %v548 = vld [vmem:[#allocation5 + $0x198] sm:$0xff]
        %v549 = vld [vmem:[#allocation5 + $0x1a0] sm:$0xff]
        %v550 = vld [vmem:[#allocation5 + $0x1a8] sm:$0xff]
        %v551 = vld [vmem:[#allocation5 + $0x1b0] sm:$0xff]
        %v552 = vld [vmem:[#allocation5 + $0x1b8] sm:$0xff]
        %v553 = vld [vmem:[#allocation5 + $0x1c0] sm:$0xff]
        %v554 = vld [vmem:[#allocation5 + $0x1c8] sm:$0xff]
        %v555 = vld [vmem:[#allocation5 + $0x1d0] sm:$0xff]
        %v556 = vld [vmem:[#allocation5 + $0x1d8] sm:$0xff]
        %v557 = vld [vmem:[#allocation5 + $0x1e0] sm:$0xff]
        %v558 = vld [vmem:[#allocation5 + $0x1e8] sm:$0xff]
        %v559 = vld [vmem:[#allocation5 + $0x1f0] sm:$0xff]
        %v560 = vld [vmem:[#allocation5 + $0x1f8] sm:$0xff]
        %561 = vmatprep.subr.mxu0 %v528
        %562 = vmatpush1.msra.mxu0 %v527
        %563 = vmatprep.subr.mxu0 %v526
        %564 = vmatpush1.msra.mxu0 %v525
        %565 = vmatprep.subr.mxu0 %v524
        %566 = vmatpush1.msra.mxu0 %v523
        %567 = vmatprep.subr.mxu0 %v522
        %568 = vmatpush1.msra.mxu0 %v521
        %569 = vmatprep.subr.mxu0 %v520
        %570 = vmatpush1.msra.mxu0 %v519
        %571 = vmatprep.subr.mxu0 %v518
        %572 = vmatpush1.msra.mxu0 %v517
        %573 = vmatprep.subr.mxu0 %v516
        %574 = vmatpush1.msra.mxu0 %v515
        %575 = vmatprep.subr.mxu0 %v514
        %576 = vmatpush1.msra.mxu0 %v513
        %577 = vmatprep.subr.mxu0 %v512
        %578 = vmatpush1.msra.mxu0 %v511
        %579 = vmatprep.subr.mxu0 %v510
        %580 = vmatpush1.msra.mxu0 %v509
        %581 = vmatprep.subr.mxu0 %v508
        %582 = vmatpush1.msra.mxu0 %v507
        %583 = vmatprep.subr.mxu0 %v506
        %584 = vmatpush1.msra.mxu0 %v505
        %585 = vmatprep.subr.mxu0 %v504
        %586 = vmatpush1.msra.mxu0 %v503
        %587 = vmatprep.subr.mxu0 %v502
        %588 = vmatpush1.msra.mxu0 %v501
        %589 = vmatprep.subr.mxu0 %v500
        %590 = vmatpush1.msra.mxu0 %v499
        %591 = vmatprep.subr.mxu0 %v498
        %592 = vmatpush1.msra.mxu0 %v497
        %593 = vmatprep.subr.mxu0 %v560
        %594 = vmatpush2.msra.mxu0 %v559
        %595 = vmatprep.subr.mxu0 %v558
        %596 = vmatpush2.msra.mxu0 %v557
        %597 = vmatprep.subr.mxu0 %v556
        %598 = vmatpush2.msra.mxu0 %v555
        %599 = vmatprep.subr.mxu0 %v554
        %600 = vmatpush2.msra.mxu0 %v553
        %601 = vmatprep.subr.mxu0 %v552
        %602 = vmatpush2.msra.mxu0 %v551
        %603 = vmatprep.subr.mxu0 %v550
        %604 = vmatpush2.msra.mxu0 %v549
        %605 = vmatprep.subr.mxu0 %v548
        %606 = vmatpush2.msra.mxu0 %v547
        %607 = vmatprep.subr.mxu0 %v546
        %608 = vmatpush2.msra.mxu0 %v545
        %609 = vmatprep.subr.mxu0 %v544
        %610 = vmatpush2.msra.mxu0 %v543
        %611 = vmatprep.subr.mxu0 %v542
        %612 = vmatpush2.msra.mxu0 %v541
        %613 = vmatprep.subr.mxu0 %v540
        %614 = vmatpush2.msra.mxu0 %v539
        %615 = vmatprep.subr.mxu0 %v538
        %616 = vmatpush2.msra.mxu0 %v537
        %617 = vmatprep.subr.mxu0 %v536
        %618 = vmatpush2.msra.mxu0 %v535
        %619 = vmatprep.subr.mxu0 %v534
        %620 = vmatpush2.msra.mxu0 %v533
        %621 = vmatprep.subr.mxu0 %v532
        %622 = vmatpush2.msra.mxu0 %v531
        %623 = vmatprep.subr.mxu0 %v530
        %624 = vmatpush2.msra.mxu0 %v529
        %625 = vmatprep.mubr.f32.mxu0 %v490
        %626 = vmatmul.mubr.f32.gmra.mxu0 %v489
        %v627 = vpop.f32.mrf.mxu0
        %v628 = vadd.f32 0.0, %v627
        %v629 = vpop.f32.mrf.mxu0
        %v630 = vadd.f32 0.0, %v629
        %631 = vmatprep.mubr.f32.mxu0 %v492
        %632 = vmatmul.mubr.f32.gmra.mxu0 %v491
        %v633 = vpop.f32.mrf.mxu0
        %v634 = vadd.f32 0.0, %v633
        %v635 = vpop.f32.mrf.mxu0
        %v636 = vadd.f32 0.0, %v635
        %637 = vdwg.mxu0
        %v638 = vld [vmem:[#allocation7] sm:$0xff]
        %v639 = vld [vmem:[#allocation7 + $0x8] sm:$0xff]
        %v640 = vld [vmem:[#allocation7 + $0x10] sm:$0xff]
        %v641 = vld [vmem:[#allocation7 + $0x18] sm:$0xff]
        %v642 = vld [vmem:[#allocation7 + $0x20] sm:$0xff]
        %v643 = vld [vmem:[#allocation7 + $0x28] sm:$0xff]
        %v644 = vld [vmem:[#allocation7 + $0x30] sm:$0xff]
        %v645 = vld [vmem:[#allocation7 + $0x38] sm:$0xff]
        %v646 = vld [vmem:[#allocation7 + $0x40] sm:$0xff]
        %v647 = vld [vmem:[#allocation7 + $0x48] sm:$0xff]
        %v648 = vld [vmem:[#allocation7 + $0x50] sm:$0xff]
        %v649 = vld [vmem:[#allocation7 + $0x58] sm:$0xff]
        %v650 = vld [vmem:[#allocation7 + $0x60] sm:$0xff]
        %v651 = vld [vmem:[#allocation7 + $0x68] sm:$0xff]
        %v652 = vld [vmem:[#allocation7 + $0x70] sm:$0xff]
        %v653 = vld [vmem:[#allocation7 + $0x78] sm:$0xff]
        %v654 = vld [vmem:[#allocation7 + $0x80] sm:$0xff]
        %v655 = vld [vmem:[#allocation7 + $0x88] sm:$0xff]
        %v656 = vld [vmem:[#allocation7 + $0x90] sm:$0xff]
        %v657 = vld [vmem:[#allocation7 + $0x98] sm:$0xff]
        %v658 = vld [vmem:[#allocation7 + $0xa0] sm:$0xff]
        %v659 = vld [vmem:[#allocation7 + $0xa8] sm:$0xff]
        %v660 = vld [vmem:[#allocation7 + $0xb0] sm:$0xff]
        %v661 = vld [vmem:[#allocation7 + $0xb8] sm:$0xff]
        %v662 = vld [vmem:[#allocation7 + $0xc0] sm:$0xff]
        %v663 = vld [vmem:[#allocation7 + $0xc8] sm:$0xff]
        %v664 = vld [vmem:[#allocation7 + $0xd0] sm:$0xff]
        %v665 = vld [vmem:[#allocation7 + $0xd8] sm:$0xff]
        %v666 = vld [vmem:[#allocation7 + $0xe0] sm:$0xff]
        %v667 = vld [vmem:[#allocation7 + $0xe8] sm:$0xff]
        %v668 = vld [vmem:[#allocation7 + $0xf0] sm:$0xff]
        %v669 = vld [vmem:[#allocation7 + $0xf8] sm:$0xff]
        %670 = vmatprep.subr.mxu0 0.0
        %671 = vmatpush1.msra.mxu0 %v653
        %672 = vmatprep.subr.mxu0 0.0
        %673 = vmatpush1.msra.mxu0 %v652
        %674 = vmatprep.subr.mxu0 0.0
        %675 = vmatpush1.msra.mxu0 %v651
        %676 = vmatprep.subr.mxu0 0.0
        %677 = vmatpush1.msra.mxu0 %v650
        %678 = vmatprep.subr.mxu0 0.0
        %679 = vmatpush1.msra.mxu0 %v649
        %680 = vmatprep.subr.mxu0 0.0
        %681 = vmatpush1.msra.mxu0 %v648
        %682 = vmatprep.subr.mxu0 0.0
        %683 = vmatpush1.msra.mxu0 %v647
        %684 = vmatprep.subr.mxu0 0.0
        %685 = vmatpush1.msra.mxu0 %v646
        %686 = vmatprep.subr.mxu0 0.0
        %687 = vmatpush1.msra.mxu0 %v645
        %688 = vmatprep.subr.mxu0 0.0
        %689 = vmatpush1.msra.mxu0 %v644
        %690 = vmatprep.subr.mxu0 0.0
        %691 = vmatpush1.msra.mxu0 %v643
        %692 = vmatprep.subr.mxu0 0.0
        %693 = vmatpush1.msra.mxu0 %v642
        %694 = vmatprep.subr.mxu0 0.0
        %695 = vmatpush1.msra.mxu0 %v641
        %696 = vmatprep.subr.mxu0 0.0
        %697 = vmatpush1.msra.mxu0 %v640
        %698 = vmatprep.subr.mxu0 0.0
        %699 = vmatpush1.msra.mxu0 %v639
        %700 = vmatprep.subr.mxu0 0.0
        %701 = vmatpush1.msra.mxu0 %v638
        %702 = vmatprep.subr.mxu0 0.0
        %703 = vmatpush2.msra.mxu0 %v669
        %704 = vmatprep.subr.mxu0 0.0
        %705 = vmatpush2.msra.mxu0 %v668
        %706 = vmatprep.subr.mxu0 0.0
        %707 = vmatpush2.msra.mxu0 %v667
        %708 = vmatprep.subr.mxu0 0.0
        %709 = vmatpush2.msra.mxu0 %v666
        %710 = vmatprep.subr.mxu0 0.0
        %711 = vmatpush2.msra.mxu0 %v665
        %712 = vmatprep.subr.mxu0 0.0
        %713 = vmatpush2.msra.mxu0 %v664
        %714 = vmatprep.subr.mxu0 0.0
        %715 = vmatpush2.msra.mxu0 %v663
        %716 = vmatprep.subr.mxu0 0.0
        %717 = vmatpush2.msra.mxu0 %v662
        %718 = vmatprep.subr.mxu0 0.0
        %719 = vmatpush2.msra.mxu0 %v661
        %720 = vmatprep.subr.mxu0 0.0
        %721 = vmatpush2.msra.mxu0 %v660
        %722 = vmatprep.subr.mxu0 0.0
        %723 = vmatpush2.msra.mxu0 %v659
        %724 = vmatprep.subr.mxu0 0.0
        %725 = vmatpush2.msra.mxu0 %v658
        %726 = vmatprep.subr.mxu0 0.0
        %727 = vmatpush2.msra.mxu0 %v657
        %728 = vmatprep.subr.mxu0 0.0
        %729 = vmatpush2.msra.mxu0 %v656
        %730 = vmatprep.subr.mxu0 0.0
        %731 = vmatpush2.msra.mxu0 %v655
        %732 = vmatprep.subr.mxu0 0.0
        %733 = vmatpush2.msra.mxu0 %v654
        %734 = vmatprep.mubr.f32.mxu0 %v490
        %735 = vmatmul.mubr.f32.gmra.mxu0 %v489
        %v736 = vpop.f32.mrf.mxu0
        %v737 = vadd.f32 0.0, %v736
        %v738 = vpop.f32.mrf.mxu0
        %739 = vmatprep.mubr.f32.mxu0 %v492
        %740 = vmatmul.mubr.f32.gmra.mxu0 %v491
        %v741 = vpop.f32.mrf.mxu0
        %v742 = vadd.f32 0.0, %v741
        %v743 = vpop.f32.mrf.mxu0
        %744 = vdwg.mxu0
        %v745 = vld [vmem:[#allocation8] sm:$0xff]
        %v746 = vld [vmem:[#allocation8 + $0x8] sm:$0xff]
        %v747 = vld [vmem:[#allocation8 + $0x10] sm:$0xff]
        %v748 = vld [vmem:[#allocation8 + $0x18] sm:$0xff]
        %v749 = vld [vmem:[#allocation8 + $0x20] sm:$0xff]
        %v750 = vld [vmem:[#allocation8 + $0x28] sm:$0xff]
        %v751 = vld [vmem:[#allocation8 + $0x30] sm:$0xff]
        %v752 = vld [vmem:[#allocation8 + $0x38] sm:$0xff]
        %v753 = vld [vmem:[#allocation8 + $0x40] sm:$0xff]
        %v754 = vld [vmem:[#allocation8 + $0x48] sm:$0xff]
        %v755 = vld [vmem:[#allocation8 + $0x50] sm:$0xff]
        %v756 = vld [vmem:[#allocation8 + $0x58] sm:$0xff]
        %v757 = vld [vmem:[#allocation8 + $0x60] sm:$0xff]
        %v758 = vld [vmem:[#allocation8 + $0x68] sm:$0xff]
        %v759 = vld [vmem:[#allocation8 + $0x70] sm:$0xff]
        %v760 = vld [vmem:[#allocation8 + $0x78] sm:$0xff]
        %v761 = vld [vmem:[#allocation8 + $0x80] sm:$0xff]
        %v762 = vld [vmem:[#allocation8 + $0x88] sm:$0xff]
        %v763 = vld [vmem:[#allocation8 + $0x90] sm:$0xff]
        %v764 = vld [vmem:[#allocation8 + $0x98] sm:$0xff]
        %v765 = vld [vmem:[#allocation8 + $0xa0] sm:$0xff]
        %v766 = vld [vmem:[#allocation8 + $0xa8] sm:$0xff]
        %v767 = vld [vmem:[#allocation8 + $0xb0] sm:$0xff]
        %v768 = vld [vmem:[#allocation8 + $0xb8] sm:$0xff]
        %v769 = vld [vmem:[#allocation8 + $0xc0] sm:$0xff]
        %v770 = vld [vmem:[#allocation8 + $0xc8] sm:$0xff]
        %v771 = vld [vmem:[#allocation8 + $0xd0] sm:$0xff]
        %v772 = vld [vmem:[#allocation8 + $0xd8] sm:$0xff]
        %v773 = vld [vmem:[#allocation8 + $0xe0] sm:$0xff]
        %v774 = vld [vmem:[#allocation8 + $0xe8] sm:$0xff]
        %v775 = vld [vmem:[#allocation8 + $0xf0] sm:$0xff]
        %v776 = vld [vmem:[#allocation8 + $0xf8] sm:$0xff]
        %777 = vmatprep.subr.mxu0 0.0
        %778 = vmatpush1.msra.mxu0 %v760
        %779 = vmatprep.subr.mxu0 0.0
        %780 = vmatpush1.msra.mxu0 %v759
        %781 = vmatprep.subr.mxu0 0.0
        %782 = vmatpush1.msra.mxu0 %v758
        %783 = vmatprep.subr.mxu0 0.0
        %784 = vmatpush1.msra.mxu0 %v757
        %785 = vmatprep.subr.mxu0 0.0
        %786 = vmatpush1.msra.mxu0 %v756
        %787 = vmatprep.subr.mxu0 0.0
        %788 = vmatpush1.msra.mxu0 %v755
        %789 = vmatprep.subr.mxu0 0.0
        %790 = vmatpush1.msra.mxu0 %v754
        %791 = vmatprep.subr.mxu0 0.0
        %792 = vmatpush1.msra.mxu0 %v753
        %793 = vmatprep.subr.mxu0 0.0
        %794 = vmatpush1.msra.mxu0 %v752
        %795 = vmatprep.subr.mxu0 0.0
        %796 = vmatpush1.msra.mxu0 %v751
        %797 = vmatprep.subr.mxu0 0.0
        %798 = vmatpush1.msra.mxu0 %v750
        %799 = vmatprep.subr.mxu0 0.0
        %800 = vmatpush1.msra.mxu0 %v749
        %801 = vmatprep.subr.mxu0 0.0
        %802 = vmatpush1.msra.mxu0 %v748
        %803 = vmatprep.subr.mxu0 0.0
        %804 = vmatpush1.msra.mxu0 %v747
        %805 = vmatprep.subr.mxu0 0.0
        %806 = vmatpush1.msra.mxu0 %v746
        %807 = vmatprep.subr.mxu0 0.0
        %808 = vmatpush1.msra.mxu0 %v745
        %809 = vmatprep.subr.mxu0 0.0
        %810 = vmatpush2.msra.mxu0 %v776
        %811 = vmatprep.subr.mxu0 0.0
        %812 = vmatpush2.msra.mxu0 %v775
        %813 = vmatprep.subr.mxu0 0.0
        %814 = vmatpush2.msra.mxu0 %v774
        %815 = vmatprep.subr.mxu0 0.0
        %816 = vmatpush2.msra.mxu0 %v773
        %817 = vmatprep.subr.mxu0 0.0
        %818 = vmatpush2.msra.mxu0 %v772
        %819 = vmatprep.subr.mxu0 0.0
        %820 = vmatpush2.msra.mxu0 %v771
        %821 = vmatprep.subr.mxu0 0.0
        %822 = vmatpush2.msra.mxu0 %v770
        %823 = vmatprep.subr.mxu0 0.0
        %824 = vmatpush2.msra.mxu0 %v769
        %825 = vmatprep.subr.mxu0 0.0
        %826 = vmatpush2.msra.mxu0 %v768
        %827 = vmatprep.subr.mxu0 0.0
        %828 = vmatpush2.msra.mxu0 %v767
        %829 = vmatprep.subr.mxu0 0.0
        %830 = vmatpush2.msra.mxu0 %v766
        %831 = vmatprep.subr.mxu0 0.0
        %832 = vmatpush2.msra.mxu0 %v765
        %833 = vmatprep.subr.mxu0 0.0
        %834 = vmatpush2.msra.mxu0 %v764
        %835 = vmatprep.subr.mxu0 0.0
        %836 = vmatpush2.msra.mxu0 %v763
        %837 = vmatprep.subr.mxu0 0.0
        %838 = vmatpush2.msra.mxu0 %v762
        %839 = vmatprep.subr.mxu0 0.0
        %840 = vmatpush2.msra.mxu0 %v761
        %841 = vmatprep.mubr.f32.mxu0 %v490
        %842 = vmatmul.mubr.f32.gmra.mxu0 %v489
        %v843 = vpop.f32.mrf.mxu0
        %v844 = vadd.f32 0.0, %v843
        %v845 = vpop.f32.mrf.mxu0
        %846 = vmatprep.mubr.f32.mxu0 %v492
        %847 = vmatmul.mubr.f32.gmra.mxu0 %v491
        %v848 = vpop.f32.mrf.mxu0
        %v849 = vadd.f32 0.0, %v848
        %v850 = vpop.f32.mrf.mxu0
        %851 = vdwg.mxu0
        %v852 = vmul.f32 %v628, %v493
        %v853 = vmul.f32 %v634, %v494
        %854 = vrot.lane.b32.xlu0 %v628, 64
        %v855 = vpop.permute.xlu0 %854
        %856 = vrot.lane.b32.xlu0 %v634, 64
        %v857 = vpop.permute.xlu0 %856
        %v858 = vmul.f32 %v855, %v495
        %v859 = vmul.f32 %v857, %v496
        %v860 = vadd.f32 %v852, %v858
        %v861 = vadd.f32 %v853, %v859
        %862 = vst [vmem:[%s468] sm:$0xff] %v860
        %863 = vst [vmem:[%s468 + $0x8] sm:$0xff] %v861
        %v864 = vmul.f32 %v630, %v493
        %v865 = vmul.f32 %v636, %v494
        %866 = vrot.lane.b32.xlu0 %v630, 64
        %v867 = vpop.permute.xlu0 %866
        %868 = vrot.lane.b32.xlu0 %v636, 64
        %v869 = vpop.permute.xlu0 %868
        %v870 = vmul.f32 %v867, %v495
        %v871 = vmul.f32 %v869, %v496
        %v872 = vadd.f32 %v864, %v870
        %v873 = vadd.f32 %v865, %v871
        %s874 = scalar_lea.vmem %s468, 16 [#allocation12]
        %875 = vst [vmem:[%s874] sm:$0xff] %v872
        %876 = vst [vmem:[%s874 + $0x8] sm:$0xff] %v873
        %v877 = vmul.f32 %v737, %v493
        %v878 = vmul.f32 %v742, %v494
        %879 = vrot.lane.b32.xlu0 %v737, 64
        %v880 = vpop.permute.xlu0 %879
        %881 = vrot.lane.b32.xlu0 %v742, 64
        %v882 = vpop.permute.xlu0 %881
        %v883 = vmul.f32 %v880, %v495
        %v884 = vmul.f32 %v882, %v496
        %v885 = vadd.f32 %v877, %v883
        %v886 = vadd.f32 %v878, %v884
        %887 = vst [vmem:[%s475] sm:$0xff] %v885
        %888 = vst [vmem:[%s475 + $0x8] sm:$0xff] %v886
        %889 = vst [vmem:[%s482] sm:$0xff] %v844
        %890 = vst [vmem:[%s482 + $0x8] sm:$0xff] %v849
        %s891 = sand.u32 %s196, 1
        %s892 = scalar_lea.sflag [#allocation4], %s891
        %s893 = sand.u32 %s196, 1
        %s894 = smul.addr %s893, 32
        %s895 = scalar_lea.vmem [#allocation12], %s894
        %s896 = sand.u32 %s31, 1
        %s897 = scalar_lea.sflag [#allocation14], %s896
        %s898 = sand.u32 %s224, 1
        %s899 = smul.addr %s898, 16
        %s900 = scalar_lea.vmem [#allocation13], %s899
        %s901 = sand.u32 %s31, 1
        %s902 = scalar_lea.sflag [#allocation14], %s901
        %s903 = sand.u32 %s252, 1
        %s904 = smul.addr %s903, 16
        %s905 = scalar_lea.vmem [#allocation15], %s904
        // Predicated region
        $region69: #{tpu_custom_call.1} parent=43 // pred_check
          %p906 = pneg %p206
        $region70: #{tpu_custom_call.1} parent=43 // pred_check_branch
          %908 = sbr.rel (%p906) target = $region72
        $region71: #{tpu_custom_call.1} parent=43 // pred_region
          #allocation17 [shape = 'u32[6]{0}', space=smem, size = 0x18, scoped, tag = 'DMA stride descriptor']
          %s909 = smul.u32 2, %s36
          %s911 = ssub.s32 512, 512
          %912 = vsyncadd %s892, %s911
          %s913 = smul.addr %s35, 8
          %s914 = sadd.s32 %s909, %s913
          %s915 = smul.addr %s914, 128
          %s916 = scalar_lea.hbm %s6, %s915
          %s918 = sshll.u32 1, 14
          %s919 = sxor.u32 4294967295, %s918
          %s922 = sshll.u32 7, 18
          %s923 = sxor.u32 4294967295, %s922
          %s924 = sand.u32 0, %s923
          %s926 = sor.u32 %s924, 0
          %s927 = sshll.u32 %s895, 4
          %s928 = int_to_ptr.vmem [resolvable:$true] %s927
          %934 = sst [smem:[#allocation17]] 256
          %s935 = scalar_lea.smem [#allocation17], 1
          %936 = sst [smem:[%s935]] 512
          %s937 = scalar_lea.smem [#allocation17], 2
          %938 = sst [smem:[%s937]] 2
          %s939 = scalar_lea.smem [#allocation17], 3
          %940 = sst [smem:[%s939]] 128
          %s941 = scalar_lea.smem [#allocation17], 4
          %942 = sst [smem:[%s941]] 128
          %s943 = scalar_lea.smem [#allocation17], 5
          %944 = sst [smem:[%s943]] 8
          %946 = dma.general %s928, 512, %s916, %s892, 131072, [#allocation17], %s926, 0
        $region72: #{tpu_custom_call.1} parent=43 // pred_fallthru
          _
        // Predicated region
        $region73: #{tpu_custom_call.1} parent=43 // pred_check
          %p947 = pneg %p234
        $region74: #{tpu_custom_call.1} parent=43 // pred_check_branch
          %949 = sbr.rel (%p947) target = $region76
        $region75: #{tpu_custom_call.1} parent=43 // pred_region
          %s950 = smul.u32 2, %s36
          %s952 = ssub.s32 256, 256
          %953 = vsyncadd %s897, %s952
          %s954 = smul.addr %s35, 4
          %s955 = sadd.s32 %s950, %s954
          %s956 = smul.addr %s955, 128
          %s957 = scalar_lea.hbm %s7, %s956
          %s958 = sshll.u32 %s900, 4
          %s959 = int_to_ptr.vmem [resolvable:$true] %s958
          %964 = dma.vmem_to_hbm [thread:$0]  %s959, 256, %s957, %s897, 128, 128, 8
        $region76: #{tpu_custom_call.1} parent=43 // pred_fallthru
          _
        // Predicated region
        $region77: #{tpu_custom_call.1} parent=43 // pred_check
          %p965 = pneg %p262
        $region78: #{tpu_custom_call.1} parent=43 // pred_check_branch
          %967 = sbr.rel (%p965) target = $region80
        $region79: #{tpu_custom_call.1} parent=43 // pred_region
          %s968 = smul.u32 2, %s36
          %s970 = ssub.s32 256, 256
          %971 = vsyncadd %s902, %s970
          %s972 = smul.addr %s35, 4
          %s973 = sadd.s32 %s968, %s972
          %s974 = smul.addr %s973, 128
          %s975 = scalar_lea.hbm %s8, %s974
          %s976 = sshll.u32 %s905, 4
          %s977 = int_to_ptr.vmem [resolvable:$true] %s976
          %982 = dma.vmem_to_hbm [thread:$0]  %s977, 256, %s975, %s902, 128, 128, 8
        $region80: #{tpu_custom_call.1} parent=43 // pred_fallthru
          _
      $region44: #{tpu_custom_call.1} parent=5 // pred_fallthru
        _
      %p983 = scmp.le.s32.totalorder 2, %s26
      // Predicated region
      $region81: #{tpu_custom_call.1} parent=5 // pred_check
        %p984 = pneg %p983
      $region82: #{tpu_custom_call.1} parent=5 // pred_check_branch
        %986 = sbr.rel (%p984) target = $region84
      $region83: #{tpu_custom_call.1} parent=5 // pred_region
        %s987 = ssub.s32 %s26, 2
        // Predicated region
        $region85: #{tpu_custom_call.1} parent=83 // pred_check
          %p988 = pneg %p212
        $region86: #{tpu_custom_call.1} parent=83 // pred_check_branch
          %990 = sbr.rel (%p988) target = $region88
        $region87: #{tpu_custom_call.1} parent=83 // pred_region
          %s991 = sand.u32 %s197, 1
          %s992 = scalar_lea.sflag [#allocation4], %s991
          %s993 = sand.u32 %s197, 1
          %s994 = smul.addr %s993, 32
          %s995 = scalar_lea.vmem [#allocation12], %s994
          %996 = dma.done %s992, 512
        $region88: #{tpu_custom_call.1} parent=83 // pred_fallthru
          _
        // Predicated region
        $region89: #{tpu_custom_call.1} parent=83 // pred_check
          %p997 = pneg %p240
        $region90: #{tpu_custom_call.1} parent=83 // pred_check_branch
          %999 = sbr.rel (%p997) target = $region92
        $region91: #{tpu_custom_call.1} parent=83 // pred_region
          %s1000 = sand.u32 %s32, 1
          %s1001 = scalar_lea.sflag [#allocation14], %s1000
          %s1002 = sand.u32 %s225, 1
          %s1003 = smul.addr %s1002, 16
          %s1004 = scalar_lea.vmem [#allocation13], %s1003
          %1005 = dma.done %s1001, 256
        $region92: #{tpu_custom_call.1} parent=83 // pred_fallthru
          _
        // Predicated region
        $region93: #{tpu_custom_call.1} parent=83 // pred_check
          %p1006 = pneg %p268
        $region94: #{tpu_custom_call.1} parent=83 // pred_check_branch
          %1008 = sbr.rel (%p1006) target = $region96
        $region95: #{tpu_custom_call.1} parent=83 // pred_region
          %s1009 = sand.u32 %s32, 1
          %s1010 = scalar_lea.sflag [#allocation14], %s1009
          %s1011 = sand.u32 %s253, 1
          %s1012 = smul.addr %s1011, 16
          %s1013 = scalar_lea.vmem [#allocation15], %s1012
          %1014 = dma.done %s1010, 256
        $region96: #{tpu_custom_call.1} parent=83 // pred_fallthru
          _
      $region84: #{tpu_custom_call.1} parent=5 // pred_fallthru
        _
    $region6: #{tpu_custom_call.1} parent=1 // loop_footer
      %s30 = sadd.s32 1, %s26
    $region7: #{tpu_custom_call.1} parent=1 // loop_footer_branch
      %25 = sbr.rel target = $region3
    $region8: #{tpu_custom_call.1} parent=1 // loop_exit
      _
    %1015 = vsyncpa [#allocation3], 1
    %s1016 = scalar_lea.sflag [#allocation3], 1
    %1017 = vsyncpa %s1016, 1
    %1018 = vsyncpa [#allocation6], 1
    %1019 = vsyncpa [#allocation9], 1
    %1020 = vsyncpa [#allocation4], 1
    %s1021 = scalar_lea.sflag [#allocation4], 1
    %1022 = vsyncpa %s1021, 1
    %1023 = vsyncpa [#allocation14], 1
    %s1024 = scalar_lea.sflag [#allocation14], 1
    %1025 = vsyncpa %s1024, 1

</llo_original>
